<compile_context>
chip_gen: v6e
topology: v6e:2x2x1
jax: 0.10.0
libtpu: 0.0.40
codegen_flags: <defaults>
</compile_context>

<pallas_src>
import functools

import jax
import jax.numpy as jnp
from jax.experimental import pallas as pl
from jax.experimental.pallas import tpu as pltpu


def _round_up(x, m):
    return (x + m - 1) // m * m


def _vmem_capacity_bytes():
    """Physical per-core VMEM; conservative fallback if the query is unavailable."""
    try:
        return int(pltpu.get_tpu_info().vmem_capacity_bytes)
    except Exception:
        return 64 << 20          # v7x has the smallest per-core VMEM


# ----------------------------- Pallas kernel --------------------------------
def _patch_embed_kernel(cells_ref, w_ref, b_ref, o_ref, *,
                        w_out, khc, m_tile, row_align):
    """One grid step: m_tile = th*w_out output rows of one (batch, frame) plane.

    cells_ref : (hc*w_out, kwc*d)  bf16  dw-unrolled space-to-depth plane (resident)
    w_ref     : (khc, kwc*d, O)    bf16  reordered conv weight (resident)
    b_ref     : (1, O)             f32   bias (resident)
    o_ref     : (m_tile, O)              output tile

    out[row, :] = bias + sum_dh cells[row + dh*w_out (in plane coords), :] @ W[dh]
    Every per-dh LHS is a contiguous slice of the resident plane -> no im2col
    copies, no scratch, no per-step cast.
    """
    rt = pl.program_id(1)
    base = rt * m_tile

    def lhs(dh):
        start = base + dh * w_out
        if row_align > 1:
            start = pl.multiple_of(start, row_align)
        return cells_ref[pl.ds(start, m_tile), :]

    acc = jnp.dot(lhs(0), w_ref[0], preferred_element_type=jnp.float32)
    for dh in range(1, khc):                     # khc is small (kh // sh == 4)
        acc += jnp.dot(lhs(dh), w_ref[dh], preferred_element_type=jnp.float32)
    o_ref[...] = (acc + b_ref[...]).astype(o_ref.dtype)


def _fused_conv_matmul(cells, w_k2o, bias_1o, *, h_out, w_out, khc, out_dtype):
    """cells: (B*T', hc*w_out, kwc*d) bf16; w: (khc, kwc*d, O_pad) bf16; bias: (1, O_pad) f32."""
    bt, hcw, k2 = cells.shape
    _, _, o_pad = w_k2o.shape
    out_isz = jnp.dtype(out_dtype).itemsize

    # --- VMEM budget & M-tile selection (v7x has only 64 MiB per core) -------
    cap = _vmem_capacity_bytes()
    cap_limit = cap * 3 // 4                    # headroom for compiler scratch
    budget = cap_limit - (8 << 20)

    cells_blk = _round_up(hcw, 16) * _round_up(k2, 128) * 2
    w_blk = khc * _round_up(k2, 16) * o_pad * 2
    b_blk = 8 * o_pad * 4

    def est_bytes(th):
        m = th * w_out
        out_blk = _round_up(m, 16) * o_pad * out_isz
        acc_tmp = 2 * m * o_pad * 4             # f32 accumulator + dot temporaries
        return 2 * (cells_blk + w_blk + b_blk + out_blk) + acc_tmp

    divisors = [t for t in range(1, h_out + 1) if h_out % t == 0]
    aligned = [t for t in divisors if (t * w_out) % 8 == 0 and est_bytes(t) <= budget]
    if aligned:
        th = max(aligned)
    else:
        fits = [t for t in divisors if est_bytes(t) <= budget]
        th = max(fits) if fits else 1           # VMEM-aware fallback
    m_tile = th * w_out
    n_row_tiles = h_out // th

    # Largest power-of-two factor of w_out: alignment hint for the LHS slices.
    row_align = 1
    while row_align < 16 and w_out % (row_align * 2) == 0:
        row_align *= 2

    vmem_limit = int(max(min(est_bytes(th) + (8 << 20), cap_limit), 32 << 20))

    m_total = bt * h_out * w_out
    cost = pl.CostEstimate(
        flops=2 * m_total * khc * k2 * o_pad,
        transcendentals=0,
        bytes_accessed=int(cells.size * 2 + w_k2o.size * 2 + bias_1o.size * 4
                           + m_total * o_pad * out_isz))

    kern = functools.partial(_patch_embed_kernel, w_out=w_out, khc=khc,
                             m_tile=m_tile, row_align=row_align)

    out = pl.pallas_call(
        kern,
        out_shape=jax.ShapeDtypeStruct((bt, h_out * w_out, o_pad), out_dtype),
        grid_spec=pltpu.PrefetchScalarGridSpec(
            num_scalar_prefetch=0,
            grid=(bt, n_row_tiles),
            in_specs=[
                # Whole dw-unrolled plane; index constant along the row-tile
                # axis, so it is DMA'd only when the (batch, frame) changes.
                pl.BlockSpec((None, hcw, k2), lambda b, r: (b, 0, 0)),
                # Weight & bias are grid-invariant -> fetched once, resident.
                # (pl.Buffered(1) would trim ~1 MiB of double-buffer; skipped
                #  for compile-safety since the saving is negligible here.)
                pl.BlockSpec((khc, k2, o_pad), lambda b, r: (0, 0, 0)),
                pl.BlockSpec((1, o_pad), lambda b, r: (0, 0)),
            ],
            out_specs=pl.BlockSpec((None, m_tile, o_pad), lambda b, r: (b, r, 0)),
        ),
        compiler_params=pltpu.CompilerParams(
            # No carried state across either axis -> both parallel (lets v7x's
            # two TensorCores split within a plane too).
            dimension_semantics=("parallel", "parallel"),
            vmem_limit_bytes=vmem_limit),
        cost_estimate=cost,
    )(cells, w_k2o, bias_1o)
    return out


# ------------------------------ PatchEmbed -----------------------------------
def patch_embed_forward(x, weight, bias, *, stride=(1, 4, 4), padding=(1, 7, 7),
                        out_dtype=None):
    """
    x:      (B, C, T, H, W)     (NCTHW == PyTorch NCDHW)
    weight: (O, C, kt, kh, kw)  PyTorch Conv3d weight layout
    bias:   (O,)
    returns (B, T'*H'*W', O)  ==  proj(x).flatten(2).transpose(1, 2)

    out_dtype defaults to x.dtype (module parity); pass jnp.bfloat16 to halve
    HBM writeback on v5e/v6e when downstream tolerates it.
    """
    b, c, t, h, w = x.shape
    o, c_w, kt, kh, kw = weight.shape
    assert c_w == c
    st, sh, sw = stride
    pt, ph, pw = padding
    # TODO(synk): only the module-default temporal config (kt=1, stride_t=1) and
    # the Conv3d path are implemented; conv_2d=True / kt>1 would need T-windows.
    assert kt == 1 and st == 1, "only kernel_t=1, stride_t=1 supported"
    assert kh % sh == 0 and kw % sw == 0, "spatial stride must divide kernel"
    if out_dtype is None:
        out_dtype = x.dtype

    t_pad = t + 2 * pt
    h_pad, w_pad = h + 2 * ph, w + 2 * pw
    t_out = (t_pad - kt) // st + 1            # == t_pad for kt=1, st=1
    h_out = (h_pad - kh) // sh + 1
    w_out = (w_pad - kw) // sw + 1
    khc, kwc = kh // sh, kw // sw             # kernel extent in cell units
    d = c * sh * sw                           # cell depth
    o_pad = _round_up(o, 128)                 # lane-dense output stores

    # --- space-to-depth + dw pre-unroll (XLA glue, ~kwc x input bytes; the ---
    # --- full K x M im2col never exists in HBM) -------------------------------
    x_p = jnp.pad(x.astype(jnp.bfloat16),
                  ((0, 0), (0, 0), (pt, pt), (ph, ph), (pw, pw)))
    need_h = (h_out - 1) * sh + kh            # rows actually read by windows
    need_w = (w_out - 1) * sw + kw
    x_p = x_p[:, :, :, :need_h, :need_w]
    hc, wc = need_h // sh, need_w // sw       # = h_out+khc-1, w_out+kwc-1
    cells = x_p.reshape(b, c, t_pad, hc, sh, wc, sw)
    cells = jnp.transpose(cells, (0, 2, 3, 5, 1, 4, 6))    # (B,T',hc,wc,C,r,s)
    cells = cells.reshape(b * t_pad, hc, wc, d)
    # dw pre-unroll: last dim becomes (dw, c, r, s) of width kwc*d, so inside
    # the kernel every per-dh LHS is one contiguous slice of the plane.
    cells = jnp.concatenate([cells[:, :, dw:dw + w_out, :] for dw in range(kwc)],
                            axis=-1)                       # (B*T',hc,w_out,kwc*d)
    cells = cells.reshape(b * t_pad, hc * w_out, kwc * d)

    # --- weight -> (khc, kwc*d, O_pad), per-dh K ordered (dw, c, r, s); bf16 --
    w_r = weight.reshape(o, c, kt, khc, sh, kwc, sw)
    w_r = jnp.transpose(w_r, (3, 5, 1, 2, 4, 6, 0))        # (dh,dw,C,kt,r,s,O)
    w_k2o = w_r.reshape(khc, kwc * d, o).astype(jnp.bfloat16)
    b_1o = bias.reshape(1, o).astype(jnp.float32)
    if o_pad != o:
        w_k2o = jnp.pad(w_k2o, ((0, 0), (0, 0), (0, o_pad - o)))
        b_1o = jnp.pad(b_1o, ((0, 0), (0, o_pad - o)))

    out = _fused_conv_matmul(cells, w_k2o, b_1o, h_out=h_out, w_out=w_out,
                             khc=khc, out_dtype=out_dtype)
    if o_pad != o:
        out = out[..., :o]
    # (B, T'*H'*W', O)  ==  proj(x).flatten(2).transpose(1, 2)
    return out.reshape(b, t_out * h_out * w_out, o)


# -------------------------------- main ---------------------------------------
if __name__ == "__main__":
    # Small but structure-preserving shapes: module-default kernel/stride/
    # padding, reduced dim_out, small input (w_out = 8 keeps M tiles 8-aligned).
    B, C, T, H, W = 2, 3, 4, 32, 32
    dim_out = 128
    kernel = (1, 16, 16)
    stride = (1, 4, 4)
    padding = (1, 7, 7)

    key = jax.random.PRNGKey(0)
    k_x, k_w, k_b = jax.random.split(key, 3)
    x = jax.random.normal(k_x, (B, C, T, H, W), dtype=jnp.float32)
    weight = jax.random.normal(k_w, (dim_out, C, *kernel), dtype=jnp.float32) * 0.02
    bias = jax.random.normal(k_b, (dim_out,), dtype=jnp.float32) * 0.02

    fwd = jax.jit(functools.partial(patch_embed_forward,
                                    stride=stride, padding=padding))
    out = fwd(x, weight, bias)
    jax.block_until_ready(out)

    # Pure-JAX reference (lax conv) for a sanity check.
    y_ref = jax.lax.conv_general_dilated(
        x, weight, window_strides=stride,
        padding=[(padding[0], padding[0]), (padding[1], padding[1]),
                 (padding[2], padding[2])],
        dimension_numbers=("NCDHW", "OIDHW", "NCDHW"))
    y_ref = y_ref + bias[None, :, None, None, None]
    ref = jnp.transpose(y_ref.reshape(B, dim_out, -1), (0, 2, 1))

    assert out.shape == ref.shape, (out.shape, ref.shape)
    # bf16 MXU inputs with f32 accumulation -> tolerance looser than pure f32.
    err = float(jnp.max(jnp.abs(out - ref)))
    assert jnp.allclose(out, ref, atol=3e-2, rtol=3e-2), err
    print("KERNEL_OK")
</pallas_src>

<mosaic_0001>
module attributes {stable_mosaic.version = 11 : i64} {
  func.func @_patch_embed_kernel(%arg0: i32, %arg1: i32, %arg2: memref<1x88x192xbf16, #tpu.memory_space<vmem>>, %arg3: memref<4x192x128xbf16, #tpu.memory_space<vmem>>, %arg4: memref<1x128xf32, #tpu.memory_space<vmem>>, %arg5: memref<1x64x128xf32, #tpu.memory_space<vmem>>) attributes {dimension_semantics = [#tpu.dimension_semantics<parallel>, #tpu.dimension_semantics<parallel>], iteration_bounds = array<i64: 12, 1>, scalar_prefetch = 0 : i64, scratch_operands = 0 : i64, tpu.core_type = #tpu.core_type<tc>, window_params = [{transform_indices = @transform_0, window_bounds = array<i64: 1, 88, 192>}, {pipeline_mode = #tpu.pipeline_mode<synchronous>, transform_indices = @transform_1, window_bounds = array<i64: 4, 192, 128>}, {pipeline_mode = #tpu.pipeline_mode<synchronous>, transform_indices = @transform_2, window_bounds = array<i64: 1, 128>}, {transform_indices = @transform_3, window_bounds = array<i64: 1, 64, 128>}]} {
    %c64_i32 = arith.constant 64 : i32
    %0 = arith.muli %arg1, %c64_i32 : i32
    %c0_i32 = arith.constant 0 : i32
    %1 = arith.addi %0, %c0_i32 : i32
    %2 = tpu.assume_multiple %1, 8 : i32
    %c0 = arith.constant 0 : index
    %3 = arith.index_cast %2 : i32 to index
    %c0_0 = arith.constant 0 : index
    %4 = vector.load %arg2[%c0, %3, %c0_0] : memref<1x88x192xbf16, #tpu.memory_space<vmem>>, vector<1x64x192xbf16>
    %5 = vector.shape_cast %4 : vector<1x64x192xbf16> to vector<64x192xbf16>
    %c0_1 = arith.constant 0 : index
    %c0_2 = arith.constant 0 : index
    %c0_3 = arith.constant 0 : index
    %6 = vector.load %arg3[%c0_1, %c0_2, %c0_3] : memref<4x192x128xbf16, #tpu.memory_space<vmem>>, vector<1x192x128xbf16>
    %7 = vector.shape_cast %6 : vector<1x192x128xbf16> to vector<192x128xbf16>
    %cst = arith.constant dense<0.000000e+00> : vector<64x128xf32>
    %8 = tpu.matmul %5, %7, %cst {dimension_numbers = #tpu.dot_dimension_numbers<[1], [0], [0], [1], [0, 0, 1, 1], [], []>} : vector<64x192xbf16>, vector<192x128xbf16>, vector<64x128xf32> -> vector<64x128xf32>
    %c8_i32 = arith.constant 8 : i32
    %9 = arith.addi %0, %c8_i32 : i32
    %10 = tpu.assume_multiple %9, 8 : i32
    %c0_4 = arith.constant 0 : index
    %11 = arith.index_cast %10 : i32 to index
    %c0_5 = arith.constant 0 : index
    %12 = vector.load %arg2[%c0_4, %11, %c0_5] : memref<1x88x192xbf16, #tpu.memory_space<vmem>>, vector<1x64x192xbf16>
    %13 = vector.shape_cast %12 : vector<1x64x192xbf16> to vector<64x192xbf16>
    %c1 = arith.constant 1 : index
    %c0_6 = arith.constant 0 : index
    %c0_7 = arith.constant 0 : index
    %14 = vector.load %arg3[%c1, %c0_6, %c0_7] : memref<4x192x128xbf16, #tpu.memory_space<vmem>>, vector<1x192x128xbf16>
    %15 = vector.shape_cast %14 : vector<1x192x128xbf16> to vector<192x128xbf16>
    %cst_8 = arith.constant dense<0.000000e+00> : vector<64x128xf32>
    %16 = tpu.matmul %13, %15, %cst_8 {dimension_numbers = #tpu.dot_dimension_numbers<[1], [0], [0], [1], [0, 0, 1, 1], [], []>} : vector<64x192xbf16>, vector<192x128xbf16>, vector<64x128xf32> -> vector<64x128xf32>
    %17 = arith.addf %8, %16 : vector<64x128xf32>
    %c16_i32 = arith.constant 16 : i32
    %18 = arith.addi %0, %c16_i32 : i32
    %19 = tpu.assume_multiple %18, 8 : i32
    %c0_9 = arith.constant 0 : index
    %20 = arith.index_cast %19 : i32 to index
    %c0_10 = arith.constant 0 : index
    %21 = vector.load %arg2[%c0_9, %20, %c0_10] : memref<1x88x192xbf16, #tpu.memory_space<vmem>>, vector<1x64x192xbf16>
    %22 = vector.shape_cast %21 : vector<1x64x192xbf16> to vector<64x192xbf16>
    %c2 = arith.constant 2 : index
    %c0_11 = arith.constant 0 : index
    %c0_12 = arith.constant 0 : index
    %23 = vector.load %arg3[%c2, %c0_11, %c0_12] : memref<4x192x128xbf16, #tpu.memory_space<vmem>>, vector<1x192x128xbf16>
    %24 = vector.shape_cast %23 : vector<1x192x128xbf16> to vector<192x128xbf16>
    %cst_13 = arith.constant dense<0.000000e+00> : vector<64x128xf32>
    %25 = tpu.matmul %22, %24, %cst_13 {dimension_numbers = #tpu.dot_dimension_numbers<[1], [0], [0], [1], [0, 0, 1, 1], [], []>} : vector<64x192xbf16>, vector<192x128xbf16>, vector<64x128xf32> -> vector<64x128xf32>
    %26 = arith.addf %17, %25 : vector<64x128xf32>
    %c24_i32 = arith.constant 24 : i32
    %27 = arith.addi %0, %c24_i32 : i32
    %28 = tpu.assume_multiple %27, 8 : i32
    %c0_14 = arith.constant 0 : index
    %29 = arith.index_cast %28 : i32 to index
    %c0_15 = arith.constant 0 : index
    %30 = vector.load %arg2[%c0_14, %29, %c0_15] : memref<1x88x192xbf16, #tpu.memory_space<vmem>>, vector<1x64x192xbf16>
    %31 = vector.shape_cast %30 : vector<1x64x192xbf16> to vector<64x192xbf16>
    %c3 = arith.constant 3 : index
    %c0_16 = arith.constant 0 : index
    %c0_17 = arith.constant 0 : index
    %32 = vector.load %arg3[%c3, %c0_16, %c0_17] : memref<4x192x128xbf16, #tpu.memory_space<vmem>>, vector<1x192x128xbf16>
    %33 = vector.shape_cast %32 : vector<1x192x128xbf16> to vector<192x128xbf16>
    %cst_18 = arith.constant dense<0.000000e+00> : vector<64x128xf32>
    %34 = tpu.matmul %31, %33, %cst_18 {dimension_numbers = #tpu.dot_dimension_numbers<[1], [0], [0], [1], [0, 0, 1, 1], [], []>} : vector<64x192xbf16>, vector<192x128xbf16>, vector<64x128xf32> -> vector<64x128xf32>
    %35 = arith.addf %26, %34 : vector<64x128xf32>
    %c0_19 = arith.constant 0 : index
    %c0_20 = arith.constant 0 : index
    %36 = vector.load %arg4[%c0_19, %c0_20] : memref<1x128xf32, #tpu.memory_space<vmem>>, vector<1x128xf32>
    %37 = vector.broadcast %36 : vector<1x128xf32> to vector<64x128xf32>
    %38 = arith.addf %35, %37 : vector<64x128xf32>
    %c0_21 = arith.constant 0 : index
    %c0_22 = arith.constant 0 : index
    %c0_23 = arith.constant 0 : index
    %39 = vector.load %arg5[%c0_21, %c0_22, %c0_23] : memref<1x64x128xf32, #tpu.memory_space<vmem>>, vector<1x64x128xf32>
    %40 = vector.shape_cast %39 : vector<1x64x128xf32> to vector<64x128xf32>
    %41 = vector.shape_cast %38 : vector<64x128xf32> to vector<1x64x128xf32>
    tpu.vector_store %arg5[%c0_21, %c0_22, %c0_23], %41 {strides = array<i32>} : memref<1x64x128xf32, #tpu.memory_space<vmem>>, vector<1x64x128xf32>,
    return
  }
  func.func @transform_0(%arg0: i32, %arg1: i32) -> (i32, i32, i32) {
    %c0_i32 = arith.constant 0 : i32
    %c0_i32_0 = arith.constant 0 : i32
    %c0_i32_1 = arith.constant 0 : i32
    return %arg0, %c0_i32, %c0_i32_0 : i32, i32, i32
  }
  func.func @transform_1(%arg0: i32, %arg1: i32) -> (i32, i32, i32) {
    %c0_i32 = arith.constant 0 : i32
    %c0_i32_0 = arith.constant 0 : i32
    %c0_i32_1 = arith.constant 0 : i32
    %c0_i32_2 = arith.constant 0 : i32
    return %c0_i32, %c0_i32_0, %c0_i32_1 : i32, i32, i32
  }
  func.func @transform_2(%arg0: i32, %arg1: i32) -> (i32, i32) {
    %c0_i32 = arith.constant 0 : i32
    %c0_i32_0 = arith.constant 0 : i32
    %c0_i32_1 = arith.constant 0 : i32
    return %c0_i32, %c0_i32_0 : i32, i32
  }
  func.func @transform_3(%arg0: i32, %arg1: i32) -> (i32, i32, i32) {
    %c0_i32 = arith.constant 0 : i32
    %c0_i32_0 = arith.constant 0 : i32
    return %arg0, %arg1, %c0_i32 : i32, i32, i32
  }
}

</mosaic_0001>

<llo_original>
// kernel: patch_embed_forward.1
$region0: #{patch_embed_forward.1}
  #allocation0 [shape = 'u32[]', space=smem, size = 0x4, offset = 0x4, fixed_abs, tag = 'smem constant byte address 0x4 - core index']
  #allocation1 [shape = 'u32[144,128]{1,0:T(1,128)}', space=vmem, size = 0x12000, scoped, tag = 'internal scratch']
  %s0 = inlined_call_operand.vmem [shape: bf16[12,88,192], index: 0, kind: input, shape index: {}]
  %s1 = inlined_call_operand.vmem [shape: bf16[4,192,128], index: 1, kind: input, shape index: {}]
  %s2 = inlined_call_operand.vmem [shape: f32[1,128], index: 2, kind: input, shape index: {}]
  %s3 = inlined_call_operand.hbm [shape: f32[12,64,128], index: 3, kind: output, shape index: {}]
  %s4 = sld [smem:[#allocation0]]
  $region45: #{patch_embed_forward.1} parent=0
    _
  %s6 = ssub.s32 1, %s4
  %s7 = scalar_select 0, %s6, %s4
  $region1: #{patch_embed_forward.1} parent=0
    #allocation2 [shape = 'u8[65536]{0}', space=vmem, size = 0x10000, scoped, tag = 'output window, operand 0']
    #allocation3 [shape = 's32[2]{0}', space=sflag, size = 0x8, scoped, tag = 'scoped memory for patch_embed_forward.1']
    %8 = vsyncpa [#allocation3], 0
    %s9 = scalar_lea.sflag [#allocation3], 1
    %10 = vsyncpa %s9, 0
    loop: start=0, step=1, limit=14
    $region2: #{patch_embed_forward.1} parent=1 // loop_pre_header
      _
    $region3: #{patch_embed_forward.1} parent=1 // loop_header
      %s12 = sphi 0, %s16
      %p13 = scmp.ge.s32.totalorder %s12, 14
      %s19 = sphi 0, %s31
      %s20 = sphi 0, %s27
      %s21 = sphi 0, %s19
      %s22 = sphi 0, %s20
      %s23 = sphi 0, %s21
      %s24 = sphi 0, %s22
      %s34 = sphi 0, %s36
      %s37 = sphi 0, %s34
      %s38 = sphi 0, %s37
      %s54 = sphi 0, %s38
      %s58 = sphi 0, %s58
      %s60 = sphi 0, %s58
      %s61 = sphi 0, %s60
      %s75 = sphi 0, %s61
      %s79 = sphi 0, %s79
      %s81 = sphi 0, %s79
      %s82 = sphi 0, %s81
      %s96 = sphi 0, %s82
      %s104 = sphi 0, %s106
      %s107 = sphi 0, %s104
      %s108 = sphi 0, %s107
      %s124 = sphi 0, %s108
    $region4: #{patch_embed_forward.1} parent=1 // loop_header_branch
      %15 = sbr.rel (%p13) target = $region8
    $region5: #{patch_embed_forward.1} parent=1 // loop_body
      %s17 = ssub.s32 %s12, 1
      %s18 = ssub.s32 %s12, 2
      %s25 = sadd.s32 1, %s20
      %p26 = scmp.ge.s32.totalorder %s25, 1
      %s27 = scalar_select %p26, 0, %s25
      %s28 = sadd.s32 1, %s19
      %s29 = scalar_select %p26, %s28, %s19
      %p30 = scmp.ge.s32.totalorder %s29, 12
      %s31 = scalar_select %p30, 0, %s29
      %s32 = ssub.s32 %s19, %s31
      %p33 = scmp.eq.s32.totalorder %s32, 0
      %s35 = sadd.s32 %s34, 1
      %s36 = scalar_select %p33, %s34, %s35
      %p39 = pneg %p33
      %p40 = scmp.eq.s32.totalorder %s12, 11
      %p41 = por %p39, %p40
      %p42 = scmp.ne.s32.totalorder %s34, %s37
      %p43 = scmp.eq.s32.totalorder %s12, 0
      %p44 = por %p42, %p43
      %p45 = scmp.ne.s32.totalorder %s34, %s37
      %p46 = scmp.eq.s32.totalorder %s17, 11
      %p47 = por %p45, %p46
      %p48 = scmp.ne.s32.totalorder %s37, %s38
      %p49 = scmp.eq.s32.totalorder %s17, 0
      %p50 = por %p48, %p49
      %p51 = scmp.ne.s32.totalorder %s37, %s38
      %p52 = scmp.eq.s32.totalorder %s18, 11
      %p53 = por %p51, %p52
      %p55 = scmp.ne.s32.totalorder %s38, %s54
      %p56 = scmp.eq.s32.totalorder %s18, 0
      %p57 = por %p55, %p56
      %s59 = sadd.s32 %s58, 1
      %p62 = scmp.eq.s32.totalorder %s12, 11
      %p63 = scmp.ne.s32.totalorder %s58, %s60
      %p64 = scmp.eq.s32.totalorder %s12, 0
      %p65 = por %p63, %p64
      %p66 = scmp.ne.s32.totalorder %s58, %s60
      %p67 = scmp.eq.s32.totalorder %s17, 11
      %p68 = por %p66, %p67
      %p69 = scmp.ne.s32.totalorder %s60, %s61
      %p70 = scmp.eq.s32.totalorder %s17, 0
      %p71 = por %p69, %p70
      %p72 = scmp.ne.s32.totalorder %s60, %s61
      %p73 = scmp.eq.s32.totalorder %s18, 11
      %p74 = por %p72, %p73
      %p76 = scmp.ne.s32.totalorder %s61, %s75
      %p77 = scmp.eq.s32.totalorder %s18, 0
      %p78 = por %p76, %p77
      %s80 = sadd.s32 %s79, 1
      %p83 = scmp.eq.s32.totalorder %s12, 11
      %p84 = scmp.ne.s32.totalorder %s79, %s81
      %p85 = scmp.eq.s32.totalorder %s12, 0
      %p86 = por %p84, %p85
      %p87 = scmp.ne.s32.totalorder %s79, %s81
      %p88 = scmp.eq.s32.totalorder %s17, 11
      %p89 = por %p87, %p88
      %p90 = scmp.ne.s32.totalorder %s81, %s82
      %p91 = scmp.eq.s32.totalorder %s17, 0
      %p92 = por %p90, %p91
      %p93 = scmp.ne.s32.totalorder %s81, %s82
      %p94 = scmp.eq.s32.totalorder %s18, 11
      %p95 = por %p93, %p94
      %p97 = scmp.ne.s32.totalorder %s82, %s96
      %p98 = scmp.eq.s32.totalorder %s18, 0
      %p99 = por %p97, %p98
      %s100 = ssub.s32 %s19, %s31
      %s101 = ssub.s32 %s20, %s27
      %s102 = sor.u32 %s100, %s101
      %p103 = scmp.eq.s32.totalorder %s102, 0
      %s105 = sadd.s32 %s104, 1
      %s106 = scalar_select %p103, %s104, %s105
      %p109 = pneg %p103
      %p110 = scmp.eq.s32.totalorder %s12, 11
      %p111 = por %p109, %p110
      %p112 = scmp.ne.s32.totalorder %s104, %s107
      %p113 = scmp.eq.s32.totalorder %s12, 0
      %p114 = por %p112, %p113
      %p115 = scmp.ne.s32.totalorder %s104, %s107
      %p116 = scmp.eq.s32.totalorder %s17, 11
      %p117 = por %p115, %p116
      %p118 = scmp.ne.s32.totalorder %s107, %s108
      %p119 = scmp.eq.s32.totalorder %s17, 0
      %p120 = por %p118, %p119
      %p121 = scmp.ne.s32.totalorder %s107, %s108
      %p122 = scmp.eq.s32.totalorder %s18, 11
      %p123 = por %p121, %p122
      %p125 = scmp.ne.s32.totalorder %s108, %s124
      %p126 = scmp.eq.s32.totalorder %s18, 0
      %p127 = por %p125, %p126
      %p128 = scmp.le.s32.totalorder 1, %s12
      %p129 = scmp.lt.s32.totalorder %s12, 13
      %p130 = pnand %p128, %p129
      %p131 = pneg %p130
      // Predicated region
      $region9: #{patch_embed_forward.1} parent=5 // pred_check
        _
      $region10: #{patch_embed_forward.1} parent=5 // pred_check_branch
        %133 = sbr.rel (%p130) target = $region12
      $region11: #{patch_embed_forward.1} parent=5 // pred_region
        %s134 = ssub.s32 %s12, 1
        // Predicated region
        $region13: #{patch_embed_forward.1} parent=11 // pred_check
          %p135 = pneg %p71
        $region14: #{patch_embed_forward.1} parent=11 // pred_check_branch
          %137 = sbr.rel (%p135) target = $region16
        $region15: #{patch_embed_forward.1} parent=11 // pred_region
          _
        $region16: #{patch_embed_forward.1} parent=11 // pred_fallthru
          _
        // Predicated region
        $region17: #{patch_embed_forward.1} parent=11 // pred_check
          %p138 = pneg %p92
        $region18: #{patch_embed_forward.1} parent=11 // pred_check_branch
          %140 = sbr.rel (%p138) target = $region20
        $region19: #{patch_embed_forward.1} parent=11 // pred_region
          _
        $region20: #{patch_embed_forward.1} parent=11 // pred_fallthru
          _
      $region12: #{patch_embed_forward.1} parent=5 // pred_fallthru
        _
      %p141 = scmp.lt.s32.totalorder %s12, 12
      // Predicated region
      $region21: #{patch_embed_forward.1} parent=5 // pred_check
        %p142 = pneg %p141
      $region22: #{patch_embed_forward.1} parent=5 // pred_check_branch
        %144 = sbr.rel (%p142) target = $region24
      $region23: #{patch_embed_forward.1} parent=5 // pred_region
        // Predicated region
        $region25: #{patch_embed_forward.1} parent=23 // pred_check
          %p145 = pneg %p44
        $region26: #{patch_embed_forward.1} parent=23 // pred_check_branch
          %147 = sbr.rel (%p145) target = $region28
        $region27: #{patch_embed_forward.1} parent=23 // pred_region
          %p148 = scmp.lt.s32.totalorder %s19, 11
          %s149 = scalar_select %p148, %s19, 11
          %s150 = smul.addr %s149, 22
          %s151 = smul.addr %s150, 4
          %s152 = scalar_lea.vmem %s0, %s151
        $region28: #{patch_embed_forward.1} parent=23 // pred_fallthru
          _
      $region24: #{patch_embed_forward.1} parent=5 // pred_fallthru
        _
      %p153 = scmp.le.s32.totalorder 1, %s12
      %p154 = scmp.lt.s32.totalorder %s12, 13
      %p155 = pnand %p153, %p154
      %p156 = pneg %p155
      // Predicated region
      $region29: #{patch_embed_forward.1} parent=5 // pred_check
        _
      $region30: #{patch_embed_forward.1} parent=5 // pred_check_branch
        %158 = sbr.rel (%p155) target = $region32
      $region31: #{patch_embed_forward.1} parent=5 // pred_region
        %s159 = ssub.s32 %s12, 1
        %p160 = scmp.lt.s32.totalorder %s21, 11
        %s161 = scalar_select %p160, %s21, 11
        %s162 = smul.addr %s161, 22
        %s163 = smul.addr %s162, 4
        %s164 = scalar_lea.vmem %s0, %s163
        %p165 = pneg %p50
        %p166 = pneg %p47
        %p167 = pneg %p71
        %p168 = pneg %p68
        %p169 = pneg %p92
        %p170 = pneg %p89
        %p171 = pneg %p120
        %p172 = pneg %p117
        %s173 = sand.u32 %s107, 1
        %s174 = scalar_lea.sflag [#allocation3], %s173
        %s175 = sand.u32 %s107, 1
        %s176 = smul.addr %s175, 64
        %s177 = scalar_lea.vmem [#allocation2], %s176
        %p178 = scmp.lt.s32.totalorder %s21, 11
        %s179 = scalar_select %p178, %s21, 11
        %s180 = smul.addr %s179, 22
        %s181 = smul.addr %s180, 4
        %s182 = scalar_lea.vmem %s0, %s181
        %s183 = smul.u32 8, %s22
        %s185 = smul.u32 %s22, 64
        %s186 = sshra.s32 %s185, 3
        %s187 = sand.u32 %s185, 7
        %s188 = smul.u32 %s186, 2
        %s189 = smul.addr %s188, 4
        %s190 = scalar_lea.vmem %s182, %s189
        %v191 = vld [vmem:[%s190] sm:$0xff]
        %v192 = vld [vmem:[%s190 + $0x8] sm:$0xff]
        %v193 = vld [vmem:[%s190 + $0x10] sm:$0xff]
        %v194 = vld [vmem:[%s190 + $0x18] sm:$0xff]
        %v195 = vld [vmem:[%s190 + $0x20] sm:$0xff]
        %v196 = vld [vmem:[%s190 + $0x28] sm:$0xff]
        %v197 = vld [vmem:[%s190 + $0x30] sm:$0xff]
        %v198 = vld [vmem:[%s190 + $0x38] sm:$0xff]
        %v199 = vld [vmem:[%s1] sm:$0xf]
        %v200 = vld [vmem:[%s1 + $0x4] sm:$0xf]
        %v201 = vld [vmem:[%s1 + $0x8] sm:$0xf]
        %v202 = vld [vmem:[%s1 + $0xc] sm:$0xf]
        %v203 = vld [vmem:[%s1 + $0x10] sm:$0xf]
        %v204 = vld [vmem:[%s1 + $0x14] sm:$0xf]
        %v205 = vld [vmem:[%s1 + $0x18] sm:$0xf]
        %v206 = vld [vmem:[%s1 + $0x1c] sm:$0xf]
        %v207 = vld [vmem:[%s1 + $0x20] sm:$0xf]
        %v208 = vld [vmem:[%s1 + $0x24] sm:$0xf]
        %v209 = vld [vmem:[%s1 + $0x28] sm:$0xf]
        %v210 = vld [vmem:[%s1 + $0x2c] sm:$0xf]
        %v211 = vld [vmem:[%s1 + $0x30] sm:$0xf]
        %v212 = vld [vmem:[%s1 + $0x34] sm:$0xf]
        %v213 = vld [vmem:[%s1 + $0x38] sm:$0xf]
        %v214 = vld [vmem:[%s1 + $0x3c] sm:$0xf]
        %v215 = vld [vmem:[%s1 + $0x40] sm:$0xf]
        %v216 = vld [vmem:[%s1 + $0x44] sm:$0xf]
        %v217 = vld [vmem:[%s1 + $0x48] sm:$0xf]
        %v218 = vld [vmem:[%s1 + $0x4c] sm:$0xf]
        %v219 = vld [vmem:[%s1 + $0x50] sm:$0xf]
        %v220 = vld [vmem:[%s1 + $0x54] sm:$0xf]
        %v221 = vld [vmem:[%s1 + $0x58] sm:$0xf]
        %v222 = vld [vmem:[%s1 + $0x5c] sm:$0xf]
        %s223 = sadd.s32 %s185, 8
        %s224 = sshra.s32 %s223, 3
        %s225 = sand.u32 %s223, 7
        %s226 = smul.u32 %s224, 2
        %s227 = smul.addr %s226, 4
        %s228 = scalar_lea.vmem %s182, %s227
        %v229 = vld [vmem:[%s228] sm:$0xff]
        %v230 = vld [vmem:[%s228 + $0x8] sm:$0xff]
        %v231 = vld [vmem:[%s228 + $0x10] sm:$0xff]
        %v232 = vld [vmem:[%s228 + $0x18] sm:$0xff]
        %v233 = vld [vmem:[%s228 + $0x20] sm:$0xff]
        %v234 = vld [vmem:[%s228 + $0x28] sm:$0xff]
        %v235 = vld [vmem:[%s228 + $0x30] sm:$0xff]
        %v236 = vld [vmem:[%s228 + $0x38] sm:$0xff]
        %s237 = scalar_lea.vmem %s1, 96
        %v238 = vld [vmem:[%s237] sm:$0xf]
        %v239 = vld [vmem:[%s237 + $0x4] sm:$0xf]
        %v240 = vld [vmem:[%s237 + $0x8] sm:$0xf]
        %v241 = vld [vmem:[%s237 + $0xc] sm:$0xf]
        %v242 = vld [vmem:[%s237 + $0x10] sm:$0xf]
        %v243 = vld [vmem:[%s237 + $0x14] sm:$0xf]
        %v244 = vld [vmem:[%s237 + $0x18] sm:$0xf]
        %v245 = vld [vmem:[%s237 + $0x1c] sm:$0xf]
        %v246 = vld [vmem:[%s237 + $0x20] sm:$0xf]
        %v247 = vld [vmem:[%s237 + $0x24] sm:$0xf]
        %v248 = vld [vmem:[%s237 + $0x28] sm:$0xf]
        %v249 = vld [vmem:[%s237 + $0x2c] sm:$0xf]
        %v250 = vld [vmem:[%s237 + $0x30] sm:$0xf]
        %v251 = vld [vmem:[%s237 + $0x34] sm:$0xf]
        %v252 = vld [vmem:[%s237 + $0x38] sm:$0xf]
        %v253 = vld [vmem:[%s237 + $0x3c] sm:$0xf]
        %v254 = vld [vmem:[%s237 + $0x40] sm:$0xf]
        %v255 = vld [vmem:[%s237 + $0x44] sm:$0xf]
        %v256 = vld [vmem:[%s237 + $0x48] sm:$0xf]
        %v257 = vld [vmem:[%s237 + $0x4c] sm:$0xf]
        %v258 = vld [vmem:[%s237 + $0x50] sm:$0xf]
        %v259 = vld [vmem:[%s237 + $0x54] sm:$0xf]
        %v260 = vld [vmem:[%s237 + $0x58] sm:$0xf]
        %v261 = vld [vmem:[%s237 + $0x5c] sm:$0xf]
        %v270 = vunpack.c.l.b16 %v229
        %v271 = vunpack.c.h.b16 %v229
        %v272 = vunpack.c.l.b16 %v230
        %v273 = vunpack.c.h.b16 %v230
        %v274 = vunpack.c.l.b16 %v231
        %v275 = vunpack.c.h.b16 %v231
        %v276 = vunpack.c.l.b16 %v232
        %v277 = vunpack.c.h.b16 %v232
        %v278 = vunpack.c.l.b16 %v233
        %v279 = vunpack.c.h.b16 %v233
        %v280 = vunpack.c.l.b16 %v234
        %v281 = vunpack.c.h.b16 %v234
        %v282 = vunpack.c.l.b16 %v235
        %v283 = vunpack.c.h.b16 %v235
        %v284 = vunpack.c.l.b16 %v236
        %v285 = vunpack.c.h.b16 %v236
        %v286 = vpack.c.b16 %v272, %v270
        %v287 = vpack.c.b16 %v273, %v271
        %v288 = vpack.c.b16 %v276, %v274
        %v289 = vpack.c.b16 %v277, %v275
        %v290 = vpack.c.b16 %v280, %v278
        %v291 = vpack.c.b16 %v281, %v279
        %v292 = vpack.c.b16 %v284, %v282
        %v293 = vpack.c.b16 %v285, %v283
        %v322 = vunpack.c.l.b16 %v238
        %v323 = vunpack.c.l.b16 %v239
        %v324 = vunpack.c.l.b16 %v240
        %v325 = vunpack.c.l.b16 %v241
        %v326 = vunpack.c.l.b16 %v242
        %v327 = vunpack.c.l.b16 %v243
        %v328 = vunpack.c.l.b16 %v244
        %v329 = vunpack.c.l.b16 %v245
        %v330 = vunpack.c.l.b16 %v246
        %v331 = vunpack.c.l.b16 %v247
        %v332 = vunpack.c.l.b16 %v248
        %v333 = vunpack.c.l.b16 %v249
        %v334 = vunpack.c.l.b16 %v250
        %v335 = vunpack.c.l.b16 %v251
        %v336 = vunpack.c.l.b16 %v252
        %v337 = vunpack.c.l.b16 %v253
        %v338 = vunpack.c.l.b16 %v254
        %v339 = vunpack.c.l.b16 %v255
        %v340 = vunpack.c.l.b16 %v256
        %v341 = vunpack.c.l.b16 %v257
        %v342 = vunpack.c.l.b16 %v258
        %v343 = vunpack.c.l.b16 %v259
        %v344 = vunpack.c.l.b16 %v260
        %v345 = vunpack.c.l.b16 %v261
        %v346 = vpack.c.b16 %v323, %v322
        %v347 = vpack.c.b16 %v325, %v324
        %v348 = vpack.c.b16 %v327, %v326
        %v349 = vpack.c.b16 %v329, %v328
        %v350 = vpack.c.b16 %v331, %v330
        %v351 = vpack.c.b16 %v333, %v332
        %v352 = vpack.c.b16 %v335, %v334
        %v353 = vpack.c.b16 %v337, %v336
        %v354 = vpack.c.b16 %v339, %v338
        %v355 = vpack.c.b16 %v341, %v340
        %v356 = vpack.c.b16 %v343, %v342
        %v357 = vpack.c.b16 %v345, %v344
        %vm370 = vcmask 523264
        %v372 = vsel %vm370, %v287, 0
        %v375 = vsel %vm370, %v289, 0
        %v378 = vsel %vm370, %v291, 0
        %v381 = vsel %vm370, %v293, 0
        %383 = vmatprep.subr.bf16.mxu0 0
        %384 = vmatpush1.bf16.msra.mxu0 %v353
        %385 = vmatprep.subr.bf16.mxu0 0
        %386 = vmatpush1.bf16.msra.mxu0 %v352
        %387 = vmatprep.subr.bf16.mxu0 0
        %388 = vmatpush1.bf16.msra.mxu0 %v351
        %389 = vmatprep.subr.bf16.mxu0 0
        %390 = vmatpush1.bf16.msra.mxu0 %v350
        %391 = vmatprep.subr.bf16.mxu0 0
        %392 = vmatpush1.bf16.msra.mxu0 %v349
        %393 = vmatprep.subr.bf16.mxu0 0
        %394 = vmatpush1.bf16.msra.mxu0 %v348
        %395 = vmatprep.subr.bf16.mxu0 0
        %396 = vmatpush1.bf16.msra.mxu0 %v347
        %397 = vmatprep.subr.bf16.mxu0 0
        %398 = vmatpush1.bf16.msra.mxu0 %v346
        %399 = vmatprep.subr.bf16.mxu0 0
        %400 = vmatpush2.bf16.msra.mxu0 0
        %401 = vmatprep.subr.bf16.mxu0 0
        %402 = vmatpush2.bf16.msra.mxu0 0
        %403 = vmatprep.subr.bf16.mxu0 0
        %404 = vmatpush2.bf16.msra.mxu0 0
        %405 = vmatprep.subr.bf16.mxu0 0
        %406 = vmatpush2.bf16.msra.mxu0 0
        %407 = vmatprep.subr.bf16.mxu0 0
        %408 = vmatpush2.bf16.msra.mxu0 %v357
        %409 = vmatprep.subr.bf16.mxu0 0
        %410 = vmatpush2.bf16.msra.mxu0 %v356
        %411 = vmatprep.subr.bf16.mxu0 0
        %412 = vmatpush2.bf16.msra.mxu0 %v355
        %413 = vmatprep.subr.bf16.mxu0 0
        %414 = vmatpush2.bf16.msra.mxu0 %v354
        %415 = vmatprep.mubr.bf16.mxu0 %v372
        %416 = vmatmul.mubr.bf16.gmra.mxu0 %v286
        %v417 = vpop.f32.mrf.mxu0
        %v418 = vadd.f32 0.0, %v417
        %v419 = vpop.f32.mrf.mxu0
        %v420 = vpop.f32.mrf.mxu0
        %v421 = vadd.f32 0.0, %v420
        %v422 = vpop.f32.mrf.mxu0
        %423 = vmatprep.mubr.bf16.mxu0 %v375
        %424 = vmatmul.mubr.bf16.gmra.mxu0 %v288
        %v425 = vpop.f32.mrf.mxu0
        %v426 = vadd.f32 0.0, %v425
        %v427 = vpop.f32.mrf.mxu0
        %v428 = vpop.f32.mrf.mxu0
        %v429 = vadd.f32 0.0, %v428
        %v430 = vpop.f32.mrf.mxu0
        %431 = vmatprep.mubr.bf16.mxu0 %v378
        %432 = vmatmul.mubr.bf16.gmra.mxu0 %v290
        %v433 = vpop.f32.mrf.mxu0
        %v434 = vadd.f32 0.0, %v433
        %v435 = vpop.f32.mrf.mxu0
        %v436 = vpop.f32.mrf.mxu0
        %v437 = vadd.f32 0.0, %v436
        %v438 = vpop.f32.mrf.mxu0
        %439 = vmatprep.mubr.bf16.mxu0 %v381
        %440 = vmatmul.mubr.bf16.gmra.mxu0 %v292
        %v441 = vpop.f32.mrf.mxu0
        %v442 = vadd.f32 0.0, %v441
        %v443 = vpop.f32.mrf.mxu0
        %v444 = vpop.f32.mrf.mxu0
        %v445 = vadd.f32 0.0, %v444
        %v446 = vpop.f32.mrf.mxu0
        %447 = vdwg.mxu0
        %v456 = vunpack.c.l.b16 %v191
        %v457 = vunpack.c.h.b16 %v191
        %v458 = vunpack.c.l.b16 %v192
        %v459 = vunpack.c.h.b16 %v192
        %v460 = vunpack.c.l.b16 %v193
        %v461 = vunpack.c.h.b16 %v193
        %v462 = vunpack.c.l.b16 %v194
        %v463 = vunpack.c.h.b16 %v194
        %v464 = vunpack.c.l.b16 %v195
        %v465 = vunpack.c.h.b16 %v195
        %v466 = vunpack.c.l.b16 %v196
        %v467 = vunpack.c.h.b16 %v196
        %v468 = vunpack.c.l.b16 %v197
        %v469 = vunpack.c.h.b16 %v197
        %v470 = vunpack.c.l.b16 %v198
        %v471 = vunpack.c.h.b16 %v198
        %v472 = vpack.c.b16 %v458, %v456
        %v473 = vpack.c.b16 %v459, %v457
        %v474 = vpack.c.b16 %v462, %v460
        %v475 = vpack.c.b16 %v463, %v461
        %v476 = vpack.c.b16 %v466, %v464
        %v477 = vpack.c.b16 %v467, %v465
        %v478 = vpack.c.b16 %v470, %v468
        %v479 = vpack.c.b16 %v471, %v469
        %v508 = vunpack.c.l.b16 %v199
        %v509 = vunpack.c.l.b16 %v200
        %v510 = vunpack.c.l.b16 %v201
        %v511 = vunpack.c.l.b16 %v202
        %v512 = vunpack.c.l.b16 %v203
        %v513 = vunpack.c.l.b16 %v204
        %v514 = vunpack.c.l.b16 %v205
        %v515 = vunpack.c.l.b16 %v206
        %v516 = vunpack.c.l.b16 %v207
        %v517 = vunpack.c.l.b16 %v208
        %v518 = vunpack.c.l.b16 %v209
        %v519 = vunpack.c.l.b16 %v210
        %v520 = vunpack.c.l.b16 %v211
        %v521 = vunpack.c.l.b16 %v212
        %v522 = vunpack.c.l.b16 %v213
        %v523 = vunpack.c.l.b16 %v214
        %v524 = vunpack.c.l.b16 %v215
        %v525 = vunpack.c.l.b16 %v216
        %v526 = vunpack.c.l.b16 %v217
        %v527 = vunpack.c.l.b16 %v218
        %v528 = vunpack.c.l.b16 %v219
        %v529 = vunpack.c.l.b16 %v220
        %v530 = vunpack.c.l.b16 %v221
        %v531 = vunpack.c.l.b16 %v222
        %v532 = vpack.c.b16 %v509, %v508
        %v533 = vpack.c.b16 %v511, %v510
        %v534 = vpack.c.b16 %v513, %v512
        %v535 = vpack.c.b16 %v515, %v514
        %v536 = vpack.c.b16 %v517, %v516
        %v537 = vpack.c.b16 %v519, %v518
        %v538 = vpack.c.b16 %v521, %v520
        %v539 = vpack.c.b16 %v523, %v522
        %v540 = vpack.c.b16 %v525, %v524
        %v541 = vpack.c.b16 %v527, %v526
        %v542 = vpack.c.b16 %v529, %v528
        %v543 = vpack.c.b16 %v531, %v530
        %v557 = vsel %vm370, %v473, 0
        %v560 = vsel %vm370, %v475, 0
        %v563 = vsel %vm370, %v477, 0
        %v566 = vsel %vm370, %v479, 0
        %568 = vmatprep.subr.bf16.mxu0 0
        %569 = vmatpush1.bf16.msra.mxu0 %v539
        %570 = vmatprep.subr.bf16.mxu0 0
        %571 = vmatpush1.bf16.msra.mxu0 %v538
        %572 = vmatprep.subr.bf16.mxu0 0
        %573 = vmatpush1.bf16.msra.mxu0 %v537
        %574 = vmatprep.subr.bf16.mxu0 0
        %575 = vmatpush1.bf16.msra.mxu0 %v536
        %576 = vmatprep.subr.bf16.mxu0 0
        %577 = vmatpush1.bf16.msra.mxu0 %v535
        %578 = vmatprep.subr.bf16.mxu0 0
        %579 = vmatpush1.bf16.msra.mxu0 %v534
        %580 = vmatprep.subr.bf16.mxu0 0
        %581 = vmatpush1.bf16.msra.mxu0 %v533
        %582 = vmatprep.subr.bf16.mxu0 0
        %583 = vmatpush1.bf16.msra.mxu0 %v532
        %584 = vmatprep.subr.bf16.mxu0 0
        %585 = vmatpush2.bf16.msra.mxu0 0
        %586 = vmatprep.subr.bf16.mxu0 0
        %587 = vmatpush2.bf16.msra.mxu0 0
        %588 = vmatprep.subr.bf16.mxu0 0
        %589 = vmatpush2.bf16.msra.mxu0 0
        %590 = vmatprep.subr.bf16.mxu0 0
        %591 = vmatpush2.bf16.msra.mxu0 0
        %592 = vmatprep.subr.bf16.mxu0 0
        %593 = vmatpush2.bf16.msra.mxu0 %v543
        %594 = vmatprep.subr.bf16.mxu0 0
        %595 = vmatpush2.bf16.msra.mxu0 %v542
        %596 = vmatprep.subr.bf16.mxu0 0
        %597 = vmatpush2.bf16.msra.mxu0 %v541
        %598 = vmatprep.subr.bf16.mxu0 0
        %599 = vmatpush2.bf16.msra.mxu0 %v540
        %600 = vmatprep.mubr.bf16.mxu0 %v557
        %601 = vmatmul.mubr.bf16.gmra.mxu0 %v472
        %v602 = vpop.f32.mrf.mxu0
        %v603 = vadd.f32 %v418, %v602
        %v604 = vpop.f32.mrf.mxu0
        %v605 = vpop.f32.mrf.mxu0
        %v606 = vadd.f32 %v421, %v605
        %v607 = vpop.f32.mrf.mxu0
        %608 = vmatprep.mubr.bf16.mxu0 %v560
        %609 = vmatmul.mubr.bf16.gmra.mxu0 %v474
        %v610 = vpop.f32.mrf.mxu0
        %v611 = vadd.f32 %v426, %v610
        %v612 = vpop.f32.mrf.mxu0
        %v613 = vpop.f32.mrf.mxu0
        %v614 = vadd.f32 %v429, %v613
        %v615 = vpop.f32.mrf.mxu0
        %616 = vmatprep.mubr.bf16.mxu0 %v563
        %617 = vmatmul.mubr.bf16.gmra.mxu0 %v476
        %v618 = vpop.f32.mrf.mxu0
        %v619 = vadd.f32 %v434, %v618
        %v620 = vpop.f32.mrf.mxu0
        %v621 = vpop.f32.mrf.mxu0
        %v622 = vadd.f32 %v437, %v621
        %v623 = vpop.f32.mrf.mxu0
        %624 = vmatprep.mubr.bf16.mxu0 %v566
        %625 = vmatmul.mubr.bf16.gmra.mxu0 %v478
        %v626 = vpop.f32.mrf.mxu0
        %v627 = vadd.f32 %v442, %v626
        %v628 = vpop.f32.mrf.mxu0
        %v629 = vpop.f32.mrf.mxu0
        %v630 = vadd.f32 %v445, %v629
        %v631 = vpop.f32.mrf.mxu0
        %632 = vdwg.mxu0
        %s633 = sadd.s32 %s185, 16
        %s634 = sshra.s32 %s633, 3
        %s635 = sand.u32 %s633, 7
        %s636 = smul.u32 %s634, 2
        %s637 = smul.addr %s636, 4
        %s638 = scalar_lea.vmem %s182, %s637
        %v639 = vld [vmem:[%s638] sm:$0xff]
        %v640 = vld [vmem:[%s638 + $0x8] sm:$0xff]
        %v641 = vld [vmem:[%s638 + $0x10] sm:$0xff]
        %v642 = vld [vmem:[%s638 + $0x18] sm:$0xff]
        %v643 = vld [vmem:[%s638 + $0x20] sm:$0xff]
        %v644 = vld [vmem:[%s638 + $0x28] sm:$0xff]
        %v645 = vld [vmem:[%s638 + $0x30] sm:$0xff]
        %v646 = vld [vmem:[%s638 + $0x38] sm:$0xff]
        %s647 = scalar_lea.vmem %s1, 192
        %v648 = vld [vmem:[%s647] sm:$0xf]
        %v649 = vld [vmem:[%s647 + $0x4] sm:$0xf]
        %v650 = vld [vmem:[%s647 + $0x8] sm:$0xf]
        %v651 = vld [vmem:[%s647 + $0xc] sm:$0xf]
        %v652 = vld [vmem:[%s647 + $0x10] sm:$0xf]
        %v653 = vld [vmem:[%s647 + $0x14] sm:$0xf]
        %v654 = vld [vmem:[%s647 + $0x18] sm:$0xf]
        %v655 = vld [vmem:[%s647 + $0x1c] sm:$0xf]
        %v656 = vld [vmem:[%s647 + $0x20] sm:$0xf]
        %v657 = vld [vmem:[%s647 + $0x24] sm:$0xf]
        %v658 = vld [vmem:[%s647 + $0x28] sm:$0xf]
        %v659 = vld [vmem:[%s647 + $0x2c] sm:$0xf]
        %v660 = vld [vmem:[%s647 + $0x30] sm:$0xf]
        %v661 = vld [vmem:[%s647 + $0x34] sm:$0xf]
        %v662 = vld [vmem:[%s647 + $0x38] sm:$0xf]
        %v663 = vld [vmem:[%s647 + $0x3c] sm:$0xf]
        %v664 = vld [vmem:[%s647 + $0x40] sm:$0xf]
        %v665 = vld [vmem:[%s647 + $0x44] sm:$0xf]
        %v666 = vld [vmem:[%s647 + $0x48] sm:$0xf]
        %v667 = vld [vmem:[%s647 + $0x4c] sm:$0xf]
        %v668 = vld [vmem:[%s647 + $0x50] sm:$0xf]
        %v669 = vld [vmem:[%s647 + $0x54] sm:$0xf]
        %v670 = vld [vmem:[%s647 + $0x58] sm:$0xf]
        %v671 = vld [vmem:[%s647 + $0x5c] sm:$0xf]
        %v680 = vunpack.c.l.b16 %v639
        %v681 = vunpack.c.h.b16 %v639
        %v682 = vunpack.c.l.b16 %v640
        %v683 = vunpack.c.h.b16 %v640
        %v684 = vunpack.c.l.b16 %v641
        %v685 = vunpack.c.h.b16 %v641
        %v686 = vunpack.c.l.b16 %v642
        %v687 = vunpack.c.h.b16 %v642
        %v688 = vunpack.c.l.b16 %v643
        %v689 = vunpack.c.h.b16 %v643
        %v690 = vunpack.c.l.b16 %v644
        %v691 = vunpack.c.h.b16 %v644
        %v692 = vunpack.c.l.b16 %v645
        %v693 = vunpack.c.h.b16 %v645
        %v694 = vunpack.c.l.b16 %v646
        %v695 = vunpack.c.h.b16 %v646
        %v696 = vpack.c.b16 %v682, %v680
        %v697 = vpack.c.b16 %v683, %v681
        %v698 = vpack.c.b16 %v686, %v684
        %v699 = vpack.c.b16 %v687, %v685
        %v700 = vpack.c.b16 %v690, %v688
        %v701 = vpack.c.b16 %v691, %v689
        %v702 = vpack.c.b16 %v694, %v692
        %v703 = vpack.c.b16 %v695, %v693
        %v732 = vunpack.c.l.b16 %v648
        %v733 = vunpack.c.l.b16 %v649
        %v734 = vunpack.c.l.b16 %v650
        %v735 = vunpack.c.l.b16 %v651
        %v736 = vunpack.c.l.b16 %v652
        %v737 = vunpack.c.l.b16 %v653
        %v738 = vunpack.c.l.b16 %v654
        %v739 = vunpack.c.l.b16 %v655
        %v740 = vunpack.c.l.b16 %v656
        %v741 = vunpack.c.l.b16 %v657
        %v742 = vunpack.c.l.b16 %v658
        %v743 = vunpack.c.l.b16 %v659
        %v744 = vunpack.c.l.b16 %v660
        %v745 = vunpack.c.l.b16 %v661
        %v746 = vunpack.c.l.b16 %v662
        %v747 = vunpack.c.l.b16 %v663
        %v748 = vunpack.c.l.b16 %v664
        %v749 = vunpack.c.l.b16 %v665
        %v750 = vunpack.c.l.b16 %v666
        %v751 = vunpack.c.l.b16 %v667
        %v752 = vunpack.c.l.b16 %v668
        %v753 = vunpack.c.l.b16 %v669
        %v754 = vunpack.c.l.b16 %v670
        %v755 = vunpack.c.l.b16 %v671
        %v756 = vpack.c.b16 %v733, %v732
        %v757 = vpack.c.b16 %v735, %v734
        %v758 = vpack.c.b16 %v737, %v736
        %v759 = vpack.c.b16 %v739, %v738
        %v760 = vpack.c.b16 %v741, %v740
        %v761 = vpack.c.b16 %v743, %v742
        %v762 = vpack.c.b16 %v745, %v744
        %v763 = vpack.c.b16 %v747, %v746
        %v764 = vpack.c.b16 %v749, %v748
        %v765 = vpack.c.b16 %v751, %v750
        %v766 = vpack.c.b16 %v753, %v752
        %v767 = vpack.c.b16 %v755, %v754
        %v781 = vsel %vm370, %v697, 0
        %v784 = vsel %vm370, %v699, 0
        %v787 = vsel %vm370, %v701, 0
        %v790 = vsel %vm370, %v703, 0
        %792 = vmatprep.subr.bf16.mxu0 0
        %793 = vmatpush1.bf16.msra.mxu0 %v763
        %794 = vmatprep.subr.bf16.mxu0 0
        %795 = vmatpush1.bf16.msra.mxu0 %v762
        %796 = vmatprep.subr.bf16.mxu0 0
        %797 = vmatpush1.bf16.msra.mxu0 %v761
        %798 = vmatprep.subr.bf16.mxu0 0
        %799 = vmatpush1.bf16.msra.mxu0 %v760
        %800 = vmatprep.subr.bf16.mxu0 0
        %801 = vmatpush1.bf16.msra.mxu0 %v759
        %802 = vmatprep.subr.bf16.mxu0 0
        %803 = vmatpush1.bf16.msra.mxu0 %v758
        %804 = vmatprep.subr.bf16.mxu0 0
        %805 = vmatpush1.bf16.msra.mxu0 %v757
        %806 = vmatprep.subr.bf16.mxu0 0
        %807 = vmatpush1.bf16.msra.mxu0 %v756
        %808 = vmatprep.subr.bf16.mxu0 0
        %809 = vmatpush2.bf16.msra.mxu0 0
        %810 = vmatprep.subr.bf16.mxu0 0
        %811 = vmatpush2.bf16.msra.mxu0 0
        %812 = vmatprep.subr.bf16.mxu0 0
        %813 = vmatpush2.bf16.msra.mxu0 0
        %814 = vmatprep.subr.bf16.mxu0 0
        %815 = vmatpush2.bf16.msra.mxu0 0
        %816 = vmatprep.subr.bf16.mxu0 0
        %817 = vmatpush2.bf16.msra.mxu0 %v767
        %818 = vmatprep.subr.bf16.mxu0 0
        %819 = vmatpush2.bf16.msra.mxu0 %v766
        %820 = vmatprep.subr.bf16.mxu0 0
        %821 = vmatpush2.bf16.msra.mxu0 %v765
        %822 = vmatprep.subr.bf16.mxu0 0
        %823 = vmatpush2.bf16.msra.mxu0 %v764
        %824 = vmatprep.mubr.bf16.mxu0 %v781
        %825 = vmatmul.mubr.bf16.gmra.mxu0 %v696
        %v826 = vpop.f32.mrf.mxu0
        %v827 = vadd.f32 0.0, %v826
        %v828 = vpop.f32.mrf.mxu0
        %v829 = vpop.f32.mrf.mxu0
        %v830 = vadd.f32 0.0, %v829
        %v831 = vpop.f32.mrf.mxu0
        %832 = vmatprep.mubr.bf16.mxu0 %v784
        %833 = vmatmul.mubr.bf16.gmra.mxu0 %v698
        %v834 = vpop.f32.mrf.mxu0
        %v835 = vadd.f32 0.0, %v834
        %v836 = vpop.f32.mrf.mxu0
        %v837 = vpop.f32.mrf.mxu0
        %v838 = vadd.f32 0.0, %v837
        %v839 = vpop.f32.mrf.mxu0
        %840 = vmatprep.mubr.bf16.mxu0 %v787
        %841 = vmatmul.mubr.bf16.gmra.mxu0 %v700
        %v842 = vpop.f32.mrf.mxu0
        %v843 = vadd.f32 0.0, %v842
        %v844 = vpop.f32.mrf.mxu0
        %v845 = vpop.f32.mrf.mxu0
        %v846 = vadd.f32 0.0, %v845
        %v847 = vpop.f32.mrf.mxu0
        %848 = vmatprep.mubr.bf16.mxu0 %v790
        %849 = vmatmul.mubr.bf16.gmra.mxu0 %v702
        %v850 = vpop.f32.mrf.mxu0
        %v851 = vadd.f32 0.0, %v850
        %v852 = vpop.f32.mrf.mxu0
        %v853 = vpop.f32.mrf.mxu0
        %v854 = vadd.f32 0.0, %v853
        %v855 = vpop.f32.mrf.mxu0
        %856 = vdwg.mxu0
        %v857 = vadd.f32 %v603, %v827
        %v858 = vadd.f32 %v606, %v830
        %v859 = vadd.f32 %v611, %v835
        %v860 = vadd.f32 %v614, %v838
        %v861 = vadd.f32 %v619, %v843
        %v862 = vadd.f32 %v622, %v846
        %v863 = vadd.f32 %v627, %v851
        %v864 = vadd.f32 %v630, %v854
        %s865 = sadd.s32 %s185, 24
        %s866 = sshra.s32 %s865, 3
        %s867 = sand.u32 %s865, 7
        %s868 = smul.u32 %s866, 2
        %s869 = smul.addr %s868, 4
        %s870 = scalar_lea.vmem %s182, %s869
        %v871 = vld [vmem:[%s870] sm:$0xff]
        %v872 = vld [vmem:[%s870 + $0x8] sm:$0xff]
        %v873 = vld [vmem:[%s870 + $0x10] sm:$0xff]
        %v874 = vld [vmem:[%s870 + $0x18] sm:$0xff]
        %v875 = vld [vmem:[%s870 + $0x20] sm:$0xff]
        %v876 = vld [vmem:[%s870 + $0x28] sm:$0xff]
        %v877 = vld [vmem:[%s870 + $0x30] sm:$0xff]
        %v878 = vld [vmem:[%s870 + $0x38] sm:$0xff]
        %s879 = scalar_lea.vmem %s1, 288
        %v880 = vld [vmem:[%s879] sm:$0xf]
        %v881 = vld [vmem:[%s879 + $0x4] sm:$0xf]
        %v882 = vld [vmem:[%s879 + $0x8] sm:$0xf]
        %v883 = vld [vmem:[%s879 + $0xc] sm:$0xf]
        %v884 = vld [vmem:[%s879 + $0x10] sm:$0xf]
        %v885 = vld [vmem:[%s879 + $0x14] sm:$0xf]
        %v886 = vld [vmem:[%s879 + $0x18] sm:$0xf]
        %v887 = vld [vmem:[%s879 + $0x1c] sm:$0xf]
        %v888 = vld [vmem:[%s879 + $0x20] sm:$0xf]
        %v889 = vld [vmem:[%s879 + $0x24] sm:$0xf]
        %v890 = vld [vmem:[%s879 + $0x28] sm:$0xf]
        %v891 = vld [vmem:[%s879 + $0x2c] sm:$0xf]
        %v892 = vld [vmem:[%s879 + $0x30] sm:$0xf]
        %v893 = vld [vmem:[%s879 + $0x34] sm:$0xf]
        %v894 = vld [vmem:[%s879 + $0x38] sm:$0xf]
        %v895 = vld [vmem:[%s879 + $0x3c] sm:$0xf]
        %v896 = vld [vmem:[%s879 + $0x40] sm:$0xf]
        %v897 = vld [vmem:[%s879 + $0x44] sm:$0xf]
        %v898 = vld [vmem:[%s879 + $0x48] sm:$0xf]
        %v899 = vld [vmem:[%s879 + $0x4c] sm:$0xf]
        %v900 = vld [vmem:[%s879 + $0x50] sm:$0xf]
        %v901 = vld [vmem:[%s879 + $0x54] sm:$0xf]
        %v902 = vld [vmem:[%s879 + $0x58] sm:$0xf]
        %v903 = vld [vmem:[%s879 + $0x5c] sm:$0xf]
        %v912 = vunpack.c.l.b16 %v871
        %v913 = vunpack.c.h.b16 %v871
        %v914 = vunpack.c.l.b16 %v872
        %v915 = vunpack.c.h.b16 %v872
        %v916 = vunpack.c.l.b16 %v873
        %v917 = vunpack.c.h.b16 %v873
        %v918 = vunpack.c.l.b16 %v874
        %v919 = vunpack.c.h.b16 %v874
        %v920 = vunpack.c.l.b16 %v875
        %v921 = vunpack.c.h.b16 %v875
        %v922 = vunpack.c.l.b16 %v876
        %v923 = vunpack.c.h.b16 %v876
        %v924 = vunpack.c.l.b16 %v877
        %v925 = vunpack.c.h.b16 %v877
        %v926 = vunpack.c.l.b16 %v878
        %v927 = vunpack.c.h.b16 %v878
        %v928 = vpack.c.b16 %v914, %v912
        %v929 = vpack.c.b16 %v915, %v913
        %v930 = vpack.c.b16 %v918, %v916
        %v931 = vpack.c.b16 %v919, %v917
        %v932 = vpack.c.b16 %v922, %v920
        %v933 = vpack.c.b16 %v923, %v921
        %v934 = vpack.c.b16 %v926, %v924
        %v935 = vpack.c.b16 %v927, %v925
        %v964 = vunpack.c.l.b16 %v880
        %v965 = vunpack.c.l.b16 %v881
        %v966 = vunpack.c.l.b16 %v882
        %v967 = vunpack.c.l.b16 %v883
        %v968 = vunpack.c.l.b16 %v884
        %v969 = vunpack.c.l.b16 %v885
        %v970 = vunpack.c.l.b16 %v886
        %v971 = vunpack.c.l.b16 %v887
        %v972 = vunpack.c.l.b16 %v888
        %v973 = vunpack.c.l.b16 %v889
        %v974 = vunpack.c.l.b16 %v890
        %v975 = vunpack.c.l.b16 %v891
        %v976 = vunpack.c.l.b16 %v892
        %v977 = vunpack.c.l.b16 %v893
        %v978 = vunpack.c.l.b16 %v894
        %v979 = vunpack.c.l.b16 %v895
        %v980 = vunpack.c.l.b16 %v896
        %v981 = vunpack.c.l.b16 %v897
        %v982 = vunpack.c.l.b16 %v898
        %v983 = vunpack.c.l.b16 %v899
        %v984 = vunpack.c.l.b16 %v900
        %v985 = vunpack.c.l.b16 %v901
        %v986 = vunpack.c.l.b16 %v902
        %v987 = vunpack.c.l.b16 %v903
        %v988 = vpack.c.b16 %v965, %v964
        %v989 = vpack.c.b16 %v967, %v966
        %v990 = vpack.c.b16 %v969, %v968
        %v991 = vpack.c.b16 %v971, %v970
        %v992 = vpack.c.b16 %v973, %v972
        %v993 = vpack.c.b16 %v975, %v974
        %v994 = vpack.c.b16 %v977, %v976
        %v995 = vpack.c.b16 %v979, %v978
        %v996 = vpack.c.b16 %v981, %v980
        %v997 = vpack.c.b16 %v983, %v982
        %v998 = vpack.c.b16 %v985, %v984
        %v999 = vpack.c.b16 %v987, %v986
        %v1013 = vsel %vm370, %v929, 0
        %v1016 = vsel %vm370, %v931, 0
        %v1019 = vsel %vm370, %v933, 0
        %v1022 = vsel %vm370, %v935, 0
        %1024 = vmatprep.subr.bf16.mxu0 0
        %1025 = vmatpush1.bf16.msra.mxu0 %v995
        %1026 = vmatprep.subr.bf16.mxu0 0
        %1027 = vmatpush1.bf16.msra.mxu0 %v994
        %1028 = vmatprep.subr.bf16.mxu0 0
        %1029 = vmatpush1.bf16.msra.mxu0 %v993
        %1030 = vmatprep.subr.bf16.mxu0 0
        %1031 = vmatpush1.bf16.msra.mxu0 %v992
        %1032 = vmatprep.subr.bf16.mxu0 0
        %1033 = vmatpush1.bf16.msra.mxu0 %v991
        %1034 = vmatprep.subr.bf16.mxu0 0
        %1035 = vmatpush1.bf16.msra.mxu0 %v990
        %1036 = vmatprep.subr.bf16.mxu0 0
        %1037 = vmatpush1.bf16.msra.mxu0 %v989
        %1038 = vmatprep.subr.bf16.mxu0 0
        %1039 = vmatpush1.bf16.msra.mxu0 %v988
        %1040 = vmatprep.subr.bf16.mxu0 0
        %1041 = vmatpush2.bf16.msra.mxu0 0
        %1042 = vmatprep.subr.bf16.mxu0 0
        %1043 = vmatpush2.bf16.msra.mxu0 0
        %1044 = vmatprep.subr.bf16.mxu0 0
        %1045 = vmatpush2.bf16.msra.mxu0 0
        %1046 = vmatprep.subr.bf16.mxu0 0
        %1047 = vmatpush2.bf16.msra.mxu0 0
        %1048 = vmatprep.subr.bf16.mxu0 0
        %1049 = vmatpush2.bf16.msra.mxu0 %v999
        %1050 = vmatprep.subr.bf16.mxu0 0
        %1051 = vmatpush2.bf16.msra.mxu0 %v998
        %1052 = vmatprep.subr.bf16.mxu0 0
        %1053 = vmatpush2.bf16.msra.mxu0 %v997
        %1054 = vmatprep.subr.bf16.mxu0 0
        %1055 = vmatpush2.bf16.msra.mxu0 %v996
        %1056 = vmatprep.mubr.bf16.mxu0 %v1013
        %1057 = vmatmul.mubr.bf16.gmra.mxu0 %v928
        %v1058 = vpop.f32.mrf.mxu0
        %v1059 = vadd.f32 0.0, %v1058
        %v1060 = vpop.f32.mrf.mxu0
        %v1061 = vpop.f32.mrf.mxu0
        %v1062 = vadd.f32 0.0, %v1061
        %v1063 = vpop.f32.mrf.mxu0
        %1064 = vmatprep.mubr.bf16.mxu0 %v1016
        %1065 = vmatmul.mubr.bf16.gmra.mxu0 %v930
        %v1066 = vpop.f32.mrf.mxu0
        %v1067 = vadd.f32 0.0, %v1066
        %v1068 = vpop.f32.mrf.mxu0
        %v1069 = vpop.f32.mrf.mxu0
        %v1070 = vadd.f32 0.0, %v1069
        %v1071 = vpop.f32.mrf.mxu0
        %1072 = vmatprep.mubr.bf16.mxu0 %v1019
        %1073 = vmatmul.mubr.bf16.gmra.mxu0 %v932
        %v1074 = vpop.f32.mrf.mxu0
        %v1075 = vadd.f32 0.0, %v1074
        %v1076 = vpop.f32.mrf.mxu0
        %v1077 = vpop.f32.mrf.mxu0
        %v1078 = vadd.f32 0.0, %v1077
        %v1079 = vpop.f32.mrf.mxu0
        %1080 = vmatprep.mubr.bf16.mxu0 %v1022
        %1081 = vmatmul.mubr.bf16.gmra.mxu0 %v934
        %v1082 = vpop.f32.mrf.mxu0
        %v1083 = vadd.f32 0.0, %v1082
        %v1084 = vpop.f32.mrf.mxu0
        %v1085 = vpop.f32.mrf.mxu0
        %v1086 = vadd.f32 0.0, %v1085
        %v1087 = vpop.f32.mrf.mxu0
        %1088 = vdwg.mxu0
        %v1089 = vadd.f32 %v857, %v1059
        %v1090 = vadd.f32 %v858, %v1062
        %v1091 = vadd.f32 %v859, %v1067
        %v1092 = vadd.f32 %v860, %v1070
        %v1093 = vadd.f32 %v861, %v1075
        %v1094 = vadd.f32 %v862, %v1078
        %v1095 = vadd.f32 %v863, %v1083
        %v1096 = vadd.f32 %v864, %v1086
        %v1097 = vld [vmem:[%s2] sm:$0x1]
        %v1099 = vlaneseq
        %v1100 = vshrl.u32 %v1099, 7
        %v1101 = vsub.s32 0, %v1100
        %v1102 = vrot.slane %v1097, %v1101
        %v1104 = vadd.f32 %v1089, %v1102
        %v1105 = vadd.f32 %v1090, %v1102
        %v1106 = vadd.f32 %v1091, %v1102
        %v1107 = vadd.f32 %v1092, %v1102
        %v1108 = vadd.f32 %v1093, %v1102
        %v1109 = vadd.f32 %v1094, %v1102
        %v1110 = vadd.f32 %v1095, %v1102
        %v1111 = vadd.f32 %v1096, %v1102
        %1112 = vst [vmem:[%s177] sm:$0xff] %v1104
        %1113 = vst [vmem:[%s177 + $0x8] sm:$0xff] %v1105
        %1114 = vst [vmem:[%s177 + $0x10] sm:$0xff] %v1106
        %1115 = vst [vmem:[%s177 + $0x18] sm:$0xff] %v1107
        %1116 = vst [vmem:[%s177 + $0x20] sm:$0xff] %v1108
        %1117 = vst [vmem:[%s177 + $0x28] sm:$0xff] %v1109
        %1118 = vst [vmem:[%s177 + $0x30] sm:$0xff] %v1110
        %1119 = vst [vmem:[%s177 + $0x38] sm:$0xff] %v1111
        %s1120 = sand.u32 %s107, 1
        %s1121 = scalar_lea.sflag [#allocation3], %s1120
        %s1122 = sand.u32 %s107, 1
        %s1123 = smul.addr %s1122, 64
        %s1124 = scalar_lea.vmem [#allocation2], %s1123
        // Predicated region
        $region33: #{patch_embed_forward.1} parent=31 // pred_check
          %p1125 = pneg %p117
        $region34: #{patch_embed_forward.1} parent=31 // pred_check_branch
          %1127 = sbr.rel (%p1125) target = $region36
        $region35: #{patch_embed_forward.1} parent=31 // pred_region
          %s1128 = smul.u32 8, %s22
          %s1130 = ssub.s32 1024, 1024
          %1131 = vsyncadd %s1121, %s1130
          %s1132 = smul.addr %s21, 8
          %s1133 = sadd.s32 %s1128, %s1132
          %s1134 = smul.addr %s1133, 128
          %s1135 = scalar_lea.hbm %s3, %s1134
          %s1136 = sshll.u32 %s1124, 4
          %s1137 = int_to_ptr.vmem [resolvable:$true] %s1136
          %1142 = dma.vmem_to_hbm [thread:$0]  %s1137, 1024, %s1135, %s1121, 128, 128, 8
        $region36: #{patch_embed_forward.1} parent=31 // pred_fallthru
          _
      $region32: #{patch_embed_forward.1} parent=5 // pred_fallthru
        _
      %p1143 = scmp.le.s32.totalorder 2, %s12
      // Predicated region
      $region37: #{patch_embed_forward.1} parent=5 // pred_check
        %p1144 = pneg %p1143
      $region38: #{patch_embed_forward.1} parent=5 // pred_check_branch
        %1146 = sbr.rel (%p1144) target = $region40
      $region39: #{patch_embed_forward.1} parent=5 // pred_region
        %s1147 = ssub.s32 %s12, 2
        // Predicated region
        $region41: #{patch_embed_forward.1} parent=39 // pred_check
          %p1148 = pneg %p123
        $region42: #{patch_embed_forward.1} parent=39 // pred_check_branch
          %1150 = sbr.rel (%p1148) target = $region44
        $region43: #{patch_embed_forward.1} parent=39 // pred_region
          %s1151 = sand.u32 %s108, 1
          %s1152 = scalar_lea.sflag [#allocation3], %s1151
          %s1153 = sand.u32 %s108, 1
          %s1154 = smul.addr %s1153, 64
          %s1155 = scalar_lea.vmem [#allocation2], %s1154
          %1156 = dma.done %s1152, 1024
        $region44: #{patch_embed_forward.1} parent=39 // pred_fallthru
          _
      $region40: #{patch_embed_forward.1} parent=5 // pred_fallthru
        _
    $region6: #{patch_embed_forward.1} parent=1 // loop_footer
      %s16 = sadd.s32 1, %s12
    $region7: #{patch_embed_forward.1} parent=1 // loop_footer_branch
      %11 = sbr.rel target = $region3
    $region8: #{patch_embed_forward.1} parent=1 // loop_exit
      _
    %1157 = vsyncpa [#allocation3], 1
    %s1158 = scalar_lea.sflag [#allocation3], 1
    %1159 = vsyncpa %s1158, 1

</llo_original>
